<compile_context>
chip_gen: v7x
topology: tpu7x:2x2x1
jax: 0.10.0
libtpu: 0.0.40
codegen_flags: <defaults>
</compile_context>

<pallas_src>
import numpy as np

import jax
import jax.numpy as jnp
from jax.experimental import pallas as pl
from jax.experimental.pallas import tpu as pltpu

N_ANCHORS = 3
ALL_ANCHORS = [(10, 13), (16, 30), (33, 23), (30, 61), (62, 45),
               (59, 119), (116, 90), (156, 198), (373, 326)]


def _yolo_decode_kernel(x_ref, w_ref, b_ref, scale_ref, code_ref, shift_ref,
                        o_ref):
    """One (batch, lane-chunk) block per grid step.

    x_ref     : (1, C, TILE)      VMEM   input feature chunk (flattened spatial)
    w_ref     : (out_ch, C)       VMEM   1x1 conv weight
    b_ref     : (out_ch, 1)       VMEM   1x1 conv bias
    scale_ref : (out_ch, 1)       VMEM   per-row scale (stride / anchor*stride / 1)
    code_ref  : (out_ch, 1)       VMEM   per-row decode code: 0=tx 1=ty 2=w/h 3=sigmoid
    shift_ref : (2, TILE)         VMEM   row 0 = x_shift, row 1 = y_shift
    o_ref     : (1, out_ch, TILE) VMEM   decoded predictions
    """
    # 1x1 conv == matmul over channels (MXU), f32 accumulation.
    y = jnp.dot(w_ref[...], x_ref[0],
                preferred_element_type=jnp.float32) + b_ref[...]

    # Full-tile activations (VPU / EUP), no sublane-misaligned slices.
    s = jax.nn.sigmoid(y)          # used by rows 0,1 and 4..n_ch-1
    e = jnp.exp(y)                 # used by rows 2,3 (may be inf elsewhere)

    code = code_ref[...]           # (out_ch, 1)
    xs = shift_ref[0:1, :]         # (1, TILE)
    ys = shift_ref[1:2, :]         # (1, TILE)

    # Per-row additive grid shift (0 for non-x/y rows), then select exp-path
    # rows.  Selects (jnp.where), never mask-multiplies: inf*0 would be NaN.
    add = jnp.where(code == 0.0, xs,
                    jnp.where(code == 1.0, ys, jnp.float32(0.0)))
    val = jnp.where(code == 2.0, e, s + add)

    o_ref[0] = (val * scale_ref[...]).astype(o_ref.dtype)


def _pick_lane_tile(hw_aligned: int, max_tile: int) -> int:
    """Largest multiple of 128 that divides hw_aligned and is <= max_tile."""
    n_lanes = hw_aligned // 128
    limit = max(1, max_tile // 128)
    best = 1
    for d in range(1, min(n_lanes, limit) + 1):
        if n_lanes % d == 0:
            best = d
    return best * 128


def yolo_layer_forward(x_nchw, weight, bias, masked_anchors_grid, stride,
                       n_classes, *, max_lane_tile=1024):
    """Inference-path forward of YOLOLayer (labels=None).

    Returns predictions of shape (B, n_anchors * fsize * fsize, 5 + n_classes),
    matching `pred.view(batchsize, -1, n_ch)` of the PyTorch module.
    """
    B, C, H, W = x_nchw.shape
    assert H == W, "YOLOLayer assumes square feature maps (fsize x fsize)."
    fsize = H
    hw = H * W
    n_ch = 5 + n_classes
    out_ch = N_ANCHORS * n_ch
    stride_f = float(stride)

    # --- lane-dim alignment & tiling ---------------------------------------
    hw_aligned = ((hw + 127) // 128) * 128
    tile = _pick_lane_tile(hw_aligned, max_lane_tile)
    n_tiles = hw_aligned // tile

    x_flat = x_nchw.reshape(B, C, hw)            # no dtype cast: bf16 stays bf16
    if hw_aligned != hw:
        x_flat = jnp.pad(x_flat, ((0, 0), (0, 0), (0, hw_aligned - hw)))

    w = jnp.asarray(weight).reshape(out_ch, C)   # native dtype for the MXU
    b = jnp.asarray(bias, dtype=jnp.float32).reshape(out_ch, 1)

    # --- host-precomputed per-row decode constants (no SMEM scalars) --------
    row = np.arange(out_ch) % n_ch
    a_idx = np.arange(out_ch) // n_ch
    anc = np.asarray(masked_anchors_grid, dtype=np.float32)      # (3, 2)
    scale_np = np.where(row < 2, stride_f,
               np.where(row == 2, anc[a_idx, 0] * stride_f,
               np.where(row == 3, anc[a_idx, 1] * stride_f, 1.0))
               ).astype(np.float32)
    code_np = np.where(row == 0, 0.0,
              np.where(row == 1, 1.0,
              np.where((row == 2) | (row == 3), 2.0, 3.0))).astype(np.float32)
    scale = jnp.asarray(scale_np).reshape(out_ch, 1)
    code = jnp.asarray(code_np).reshape(out_ch, 1)

    # Grid shifts: x_shift varies along W (fast axis), y_shift along H.
    col = np.arange(fsize, dtype=np.float32)
    shifts_np = np.zeros((2, hw_aligned), dtype=np.float32)
    shifts_np[0, :hw] = np.tile(col, fsize)       # x_shift
    shifts_np[1, :hw] = np.repeat(col, fsize)     # y_shift
    shifts = jnp.asarray(shifts_np)

    out = pl.pallas_call(
        _yolo_decode_kernel,
        out_shape=jax.ShapeDtypeStruct((B, out_ch, hw_aligned), jnp.float32),
        grid_spec=pltpu.PrefetchScalarGridSpec(
            num_scalar_prefetch=0,
            grid=(B, n_tiles),
            in_specs=[
                pl.BlockSpec((1, C, tile), lambda bb, tt: (bb, 0, tt)),
                pl.BlockSpec((out_ch, C), lambda bb, tt: (0, 0)),
                pl.BlockSpec((out_ch, 1), lambda bb, tt: (0, 0)),
                pl.BlockSpec((out_ch, 1), lambda bb, tt: (0, 0)),
                pl.BlockSpec((out_ch, 1), lambda bb, tt: (0, 0)),
                pl.BlockSpec((2, tile), lambda bb, tt: (0, tt)),
            ],
            out_specs=pl.BlockSpec((1, out_ch, tile),
                                   lambda bb, tt: (bb, 0, tt)),
        ),
        compiler_params=pltpu.CompilerParams(
            dimension_semantics=("parallel", "parallel")),
    )(x_flat, w, b, scale, code, shifts)

    # Strip lane padding and reproduce the PyTorch output layout:
    # view(B, nA, n_ch, H, W).permute(0,1,3,4,2).view(B, -1, n_ch).
    # (If the consumer can take (B, out_ch, HW) directly this relayout can be
    #  dropped — kept here to match the module's return contract.)
    out = out[:, :, :hw]
    out = out.reshape(B, N_ANCHORS, n_ch, fsize, fsize)
    out = jnp.transpose(out, (0, 1, 3, 4, 2))
    return out.reshape(B, N_ANCHORS * fsize * fsize, n_ch)


def _reference_jax(x_nchw, weight, bias, masked_anchors_grid, stride,
                   n_classes):
    """Pure-JAX reference mirroring the PyTorch forward (labels=None)."""
    B, C, H, W = x_nchw.shape
    fsize = H
    n_ch = 5 + n_classes
    out = jnp.einsum('oc,bchw->bohw', weight, x_nchw) + bias[None, :, None, None]
    out = out.reshape(B, N_ANCHORS, n_ch, fsize, fsize)
    out = jnp.transpose(out, (0, 1, 3, 4, 2))          # (B, nA, H, W, n_ch)
    sig_idx = jnp.array([0, 1] + list(range(4, n_ch)))
    out = out.at[..., sig_idx].set(jax.nn.sigmoid(out[..., sig_idx]))
    col = jnp.arange(fsize, dtype=jnp.float32)
    x_shift = jnp.broadcast_to(col[None, None, None, :], out.shape[:4])
    y_shift = jnp.broadcast_to(col[None, None, :, None], out.shape[:4])
    anchors = jnp.asarray(masked_anchors_grid, dtype=jnp.float32)
    w_anc = jnp.broadcast_to(anchors[:, 0][None, :, None, None], out.shape[:4])
    h_anc = jnp.broadcast_to(anchors[:, 1][None, :, None, None], out.shape[:4])
    pred = out
    pred = pred.at[..., 0].add(x_shift)
    pred = pred.at[..., 1].add(y_shift)
    pred = pred.at[..., 2].set(jnp.exp(pred[..., 2]) * w_anc)
    pred = pred.at[..., 3].set(jnp.exp(pred[..., 3]) * h_anc)
    pred = pred.at[..., :4].multiply(float(stride))
    return pred.reshape(B, -1, n_ch)


if __name__ == "__main__":
    # Small, deterministic configuration consistent with the module.
    batch = 2
    in_ch = 32
    fsize = 16
    n_classes = 4
    stride = 32
    anch_mask = [6, 7, 8]
    n_ch = 5 + n_classes
    out_ch = N_ANCHORS * n_ch

    masked_anchors_grid = [(w / stride, h / stride)
                           for w, h in (ALL_ANCHORS[i] for i in anch_mask)]

    key = jax.random.PRNGKey(0)
    kx, kw, kb = jax.random.split(key, 3)
    x = jax.random.normal(kx, (batch, in_ch, fsize, fsize), dtype=jnp.float32)
    weight = jax.random.normal(kw, (out_ch, in_ch), dtype=jnp.float32) * 0.05
    bias = jax.random.normal(kb, (out_ch,), dtype=jnp.float32) * 0.05

    pred = yolo_layer_forward(x, weight, bias, masked_anchors_grid, stride,
                              n_classes)
    pred = jax.block_until_ready(pred)

    ref = _reference_jax(x, weight, bias, masked_anchors_grid, stride,
                         n_classes)
    assert pred.shape == (batch, N_ANCHORS * fsize * fsize, n_ch), pred.shape
    assert jnp.allclose(pred, ref, rtol=1e-4, atol=1e-4), float(
        jnp.max(jnp.abs(pred - ref)))

    print("KERNEL_OK")
</pallas_src>

<mosaic_0001>
module attributes {stable_mosaic.version = 11 : i64} {
  func.func @_yolo_decode_kernel(%arg0: i32, %arg1: i32, %arg2: memref<1x32x256xf32, #tpu.memory_space<vmem>>, %arg3: memref<27x32xf32, #tpu.memory_space<vmem>>, %arg4: memref<27x1xf32, #tpu.memory_space<vmem>>, %arg5: memref<27x1xf32, #tpu.memory_space<vmem>>, %arg6: memref<27x1xf32, #tpu.memory_space<vmem>>, %arg7: memref<2x256xf32, #tpu.memory_space<vmem>>, %arg8: memref<1x27x256xf32, #tpu.memory_space<vmem>>) attributes {dimension_semantics = [#tpu.dimension_semantics<parallel>, #tpu.dimension_semantics<parallel>], iteration_bounds = array<i64: 2, 1>, scalar_prefetch = 0 : i64, scratch_operands = 0 : i64, tpu.core_type = #tpu.core_type<tc>, window_params = [{transform_indices = @transform_0, window_bounds = array<i64: 1, 32, 256>}, {pipeline_mode = #tpu.pipeline_mode<synchronous>, transform_indices = @transform_1, window_bounds = array<i64: 27, 32>}, {pipeline_mode = #tpu.pipeline_mode<synchronous>, transform_indices = @transform_2, window_bounds = array<i64: 27, 1>}, {pipeline_mode = #tpu.pipeline_mode<synchronous>, transform_indices = @transform_3, window_bounds = array<i64: 27, 1>}, {pipeline_mode = #tpu.pipeline_mode<synchronous>, transform_indices = @transform_4, window_bounds = array<i64: 27, 1>}, {transform_indices = @transform_5, window_bounds = array<i64: 2, 256>}, {transform_indices = @transform_6, window_bounds = array<i64: 1, 27, 256>}]} {
    %c0 = arith.constant 0 : index
    %c0_0 = arith.constant 0 : index
    %0 = vector.load %arg3[%c0, %c0_0] : memref<27x32xf32, #tpu.memory_space<vmem>>, vector<27x32xf32>
    %c0_1 = arith.constant 0 : index
    %c0_2 = arith.constant 0 : index
    %c0_3 = arith.constant 0 : index
    %1 = vector.load %arg2[%c0_1, %c0_2, %c0_3] : memref<1x32x256xf32, #tpu.memory_space<vmem>>, vector<1x32x256xf32>
    %2 = vector.shape_cast %1 : vector<1x32x256xf32> to vector<32x256xf32>
    %cst = arith.constant dense<0.000000e+00> : vector<27x256xf32>
    %3 = tpu.matmul %0, %2, %cst {dimension_numbers = #tpu.dot_dimension_numbers<[1], [0], [0], [1], [0, 0, 1, 1], [], []>} : vector<27x32xf32>, vector<32x256xf32>, vector<27x256xf32> -> vector<27x256xf32>
    %c0_4 = arith.constant 0 : index
    %c0_5 = arith.constant 0 : index
    %4 = vector.load %arg4[%c0_4, %c0_5] : memref<27x1xf32, #tpu.memory_space<vmem>>, vector<27x1xf32>
    %5 = vector.broadcast %4 : vector<27x1xf32> to vector<27x256xf32>
    %6 = arith.addf %3, %5 : vector<27x256xf32>
    %7 = arith.negf %6 : vector<27x256xf32>
    %8 = math.exp %7 : vector<27x256xf32>
    %cst_6 = arith.constant 1.000000e+00 : f32
    %9 = vector.broadcast %cst_6 : f32 to vector<27x256xf32>
    %10 = arith.addf %9, %8 : vector<27x256xf32>
    %11 = arith.divf %9, %10 : vector<27x256xf32>
    %12 = math.exp %6 : vector<27x256xf32>
    %c0_7 = arith.constant 0 : index
    %c0_8 = arith.constant 0 : index
    %13 = vector.load %arg6[%c0_7, %c0_8] : memref<27x1xf32, #tpu.memory_space<vmem>>, vector<27x1xf32>
    %c0_9 = arith.constant 0 : index
    %c0_10 = arith.constant 0 : index
    %14 = vector.load %arg7[%c0_9, %c0_10] : memref<2x256xf32, #tpu.memory_space<vmem>>, vector<1x256xf32>
    %c1 = arith.constant 1 : index
    %c0_11 = arith.constant 0 : index
    %15 = vector.load %arg7[%c1, %c0_11] : memref<2x256xf32, #tpu.memory_space<vmem>>, vector<1x256xf32>
    %cst_12 = arith.constant 0.000000e+00 : f32
    %16 = vector.broadcast %cst_12 : f32 to vector<27x1xf32>
    %17 = arith.cmpf oeq, %13, %16 : vector<27x1xf32>
    %cst_13 = arith.constant 1.000000e+00 : f32
    %18 = vector.broadcast %cst_13 : f32 to vector<27x1xf32>
    %19 = arith.cmpf oeq, %13, %18 : vector<27x1xf32>
    %cst_14 = arith.constant 0.000000e+00 : f32
    %20 = vector.shape_cast %19 : vector<27x1xi1> to vector<27x1xi1>
    %21 = vector.broadcast %20 : vector<27x1xi1> to vector<27x256xi1>
    %22 = vector.shape_cast %15 : vector<1x256xf32> to vector<1x256xf32>
    %23 = vector.broadcast %22 : vector<1x256xf32> to vector<27x256xf32>
    %24 = vector.broadcast %cst_14 : f32 to vector<27x256xf32>
    %25 = arith.select %21, %23, %24 : vector<27x256xi1>, vector<27x256xf32>
    %26 = vector.shape_cast %17 : vector<27x1xi1> to vector<27x1xi1>
    %27 = vector.broadcast %26 : vector<27x1xi1> to vector<27x256xi1>
    %28 = vector.shape_cast %14 : vector<1x256xf32> to vector<1x256xf32>
    %29 = vector.broadcast %28 : vector<1x256xf32> to vector<27x256xf32>
    %30 = arith.select %27, %29, %25 : vector<27x256xi1>, vector<27x256xf32>
    %cst_15 = arith.constant 2.000000e+00 : f32
    %31 = vector.broadcast %cst_15 : f32 to vector<27x1xf32>
    %32 = arith.cmpf oeq, %13, %31 : vector<27x1xf32>
    %33 = arith.addf %11, %30 : vector<27x256xf32>
    %34 = vector.shape_cast %32 : vector<27x1xi1> to vector<27x1xi1>
    %35 = vector.broadcast %34 : vector<27x1xi1> to vector<27x256xi1>
    %36 = arith.select %35, %12, %33 : vector<27x256xi1>, vector<27x256xf32>
    %c0_16 = arith.constant 0 : index
    %c0_17 = arith.constant 0 : index
    %37 = vector.load %arg5[%c0_16, %c0_17] : memref<27x1xf32, #tpu.memory_space<vmem>>, vector<27x1xf32>
    %38 = vector.broadcast %37 : vector<27x1xf32> to vector<27x256xf32>
    %39 = arith.mulf %36, %38 : vector<27x256xf32>
    %c0_18 = arith.constant 0 : index
    %c0_19 = arith.constant 0 : index
    %c0_20 = arith.constant 0 : index
    %40 = vector.load %arg8[%c0_18, %c0_19, %c0_20] : memref<1x27x256xf32, #tpu.memory_space<vmem>>, vector<1x27x256xf32>
    %41 = vector.shape_cast %40 : vector<1x27x256xf32> to vector<27x256xf32>
    %42 = vector.shape_cast %39 : vector<27x256xf32> to vector<1x27x256xf32>
    tpu.vector_store %arg8[%c0_18, %c0_19, %c0_20], %42 {strides = array<i32>} : memref<1x27x256xf32, #tpu.memory_space<vmem>>, vector<1x27x256xf32>,
    return
  }
  func.func @transform_0(%arg0: i32, %arg1: i32) -> (i32, i32, i32) {
    %c0_i32 = arith.constant 0 : i32
    %c0_i32_0 = arith.constant 0 : i32
    return %arg0, %c0_i32, %arg1 : i32, i32, i32
  }
  func.func @transform_1(%arg0: i32, %arg1: i32) -> (i32, i32) {
    %c0_i32 = arith.constant 0 : i32
    %c0_i32_0 = arith.constant 0 : i32
    %c0_i32_1 = arith.constant 0 : i32
    return %c0_i32, %c0_i32_0 : i32, i32
  }
  func.func @transform_2(%arg0: i32, %arg1: i32) -> (i32, i32) {
    %c0_i32 = arith.constant 0 : i32
    %c0_i32_0 = arith.constant 0 : i32
    %c0_i32_1 = arith.constant 0 : i32
    return %c0_i32, %c0_i32_0 : i32, i32
  }
  func.func @transform_3(%arg0: i32, %arg1: i32) -> (i32, i32) {
    %c0_i32 = arith.constant 0 : i32
    %c0_i32_0 = arith.constant 0 : i32
    %c0_i32_1 = arith.constant 0 : i32
    return %c0_i32, %c0_i32_0 : i32, i32
  }
  func.func @transform_4(%arg0: i32, %arg1: i32) -> (i32, i32) {
    %c0_i32 = arith.constant 0 : i32
    %c0_i32_0 = arith.constant 0 : i32
    %c0_i32_1 = arith.constant 0 : i32
    return %c0_i32, %c0_i32_0 : i32, i32
  }
  func.func @transform_5(%arg0: i32, %arg1: i32) -> (i32, i32) {
    %c0_i32 = arith.constant 0 : i32
    %c0_i32_0 = arith.constant 0 : i32
    return %c0_i32, %arg1 : i32, i32
  }
  func.func @transform_6(%arg0: i32, %arg1: i32) -> (i32, i32, i32) {
    %c0_i32 = arith.constant 0 : i32
    %c0_i32_0 = arith.constant 0 : i32
    return %arg0, %c0_i32, %arg1 : i32, i32, i32
  }
}

</mosaic_0001>

<llo_original>
// kernel: tpu_custom_call.1
$region0: #{tpu_custom_call.1}
  #allocation0 [shape = 'u32[]', space=smem, size = 0x4, offset = 0x4, fixed_abs, tag = 'smem constant byte address 0x4 - core index']
  #allocation1 [shape = 'u32[144,128]{1,0:T(1,128)}', space=vmem, size = 0x12000, scoped, tag = 'internal scratch']
  %s0 = inlined_call_operand.hbm [shape: f32[2,32,256], index: 0, kind: input, shape index: {}]
  %s1 = inlined_call_operand.vmem [shape: f32[27,32], index: 1, kind: input, shape index: {}]
  %s2 = inlined_call_operand.vmem [shape: f32[27,1], index: 2, kind: input, shape index: {}]
  %s3 = inlined_call_operand.vmem [shape: f32[27,1], index: 3, kind: input, shape index: {}]
  %s4 = inlined_call_operand.vmem [shape: f32[27,1], index: 4, kind: input, shape index: {}]
  %s5 = inlined_call_operand.vmem [shape: f32[2,256], index: 5, kind: input, shape index: {}]
  %s6 = inlined_call_operand.vmem [shape: f32[2,27,256], index: 6, kind: output, shape index: {}]
  %s7 = sld [smem:[#allocation0]]
  $region61: #{tpu_custom_call.1} parent=0
    _
  %s9 = ssub.s32 1, %s7
  %s10 = scalar_select 0, %s9, %s7
  $region1: #{tpu_custom_call.1} parent=0
    #allocation2 [shape = 'u8[65536]{0}', space=vmem, size = 0x10000, scoped, tag = 'input window, operand 0']
    #allocation3 [shape = 's32[2]{0}', space=sflag, size = 0x8, scoped, tag = 'scoped memory for tpu_custom_call.1']
    %11 = vsyncpa [#allocation3], 0
    %s12 = scalar_lea.sflag [#allocation3], 1
    %13 = vsyncpa %s12, 0
    loop: start=0, step=1, limit=4
    $region2: #{tpu_custom_call.1} parent=1 // loop_pre_header
      _
    $region3: #{tpu_custom_call.1} parent=1 // loop_header
      %s15 = sphi 0, %s19
      %p16 = scmp.ge.s32.totalorder %s15, 4
      %s22 = sphi 0, %s34
      %s23 = sphi 0, %s30
      %s24 = sphi 0, %s22
      %s25 = sphi 0, %s23
      %s26 = sphi 0, %s24
      %s27 = sphi 0, %s25
      %s39 = sphi 0, %s41
      %s42 = sphi 0, %s39
      %s43 = sphi 0, %s42
      %s59 = sphi 0, %s43
      %s63 = sphi 0, %s63
      %s65 = sphi 0, %s63
      %s66 = sphi 0, %s65
      %s80 = sphi 0, %s66
      %s84 = sphi 0, %s84
      %s86 = sphi 0, %s84
      %s87 = sphi 0, %s86
      %s101 = sphi 0, %s87
      %s105 = sphi 0, %s105
      %s107 = sphi 0, %s105
      %s108 = sphi 0, %s107
      %s122 = sphi 0, %s108
      %s126 = sphi 0, %s126
      %s128 = sphi 0, %s126
      %s129 = sphi 0, %s128
      %s143 = sphi 0, %s129
      %s149 = sphi 0, %s151
      %s152 = sphi 0, %s149
      %s153 = sphi 0, %s152
      %s169 = sphi 0, %s153
      %s177 = sphi 0, %s179
      %s180 = sphi 0, %s177
      %s181 = sphi 0, %s180
      %s197 = sphi 0, %s181
    $region4: #{tpu_custom_call.1} parent=1 // loop_header_branch
      %18 = sbr.rel (%p16) target = $region8
    $region5: #{tpu_custom_call.1} parent=1 // loop_body
      %s20 = ssub.s32 %s15, 1
      %s21 = ssub.s32 %s15, 2
      %s28 = sadd.s32 1, %s23
      %p29 = scmp.ge.s32.totalorder %s28, 1
      %s30 = scalar_select %p29, 0, %s28
      %s31 = sadd.s32 1, %s22
      %s32 = scalar_select %p29, %s31, %s22
      %p33 = scmp.ge.s32.totalorder %s32, 2
      %s34 = scalar_select %p33, 0, %s32
      %s35 = ssub.s32 %s22, %s34
      %s36 = ssub.s32 %s23, %s30
      %s37 = sor.u32 %s35, %s36
      %p38 = scmp.eq.s32.totalorder %s37, 0
      %s40 = sadd.s32 %s39, 1
      %s41 = scalar_select %p38, %s39, %s40
      %p44 = pneg %p38
      %p45 = scmp.eq.s32.totalorder %s15, 1
      %p46 = por %p44, %p45
      %p47 = scmp.ne.s32.totalorder %s39, %s42
      %p48 = scmp.eq.s32.totalorder %s15, 0
      %p49 = por %p47, %p48
      %p50 = scmp.ne.s32.totalorder %s39, %s42
      %p51 = scmp.eq.s32.totalorder %s20, 1
      %p52 = por %p50, %p51
      %p53 = scmp.ne.s32.totalorder %s42, %s43
      %p54 = scmp.eq.s32.totalorder %s20, 0
      %p55 = por %p53, %p54
      %p56 = scmp.ne.s32.totalorder %s42, %s43
      %p57 = scmp.eq.s32.totalorder %s21, 1
      %p58 = por %p56, %p57
      %p60 = scmp.ne.s32.totalorder %s43, %s59
      %p61 = scmp.eq.s32.totalorder %s21, 0
      %p62 = por %p60, %p61
      %s64 = sadd.s32 %s63, 1
      %p67 = scmp.eq.s32.totalorder %s15, 1
      %p68 = scmp.ne.s32.totalorder %s63, %s65
      %p69 = scmp.eq.s32.totalorder %s15, 0
      %p70 = por %p68, %p69
      %p71 = scmp.ne.s32.totalorder %s63, %s65
      %p72 = scmp.eq.s32.totalorder %s20, 1
      %p73 = por %p71, %p72
      %p74 = scmp.ne.s32.totalorder %s65, %s66
      %p75 = scmp.eq.s32.totalorder %s20, 0
      %p76 = por %p74, %p75
      %p77 = scmp.ne.s32.totalorder %s65, %s66
      %p78 = scmp.eq.s32.totalorder %s21, 1
      %p79 = por %p77, %p78
      %p81 = scmp.ne.s32.totalorder %s66, %s80
      %p82 = scmp.eq.s32.totalorder %s21, 0
      %p83 = por %p81, %p82
      %s85 = sadd.s32 %s84, 1
      %p88 = scmp.eq.s32.totalorder %s15, 1
      %p89 = scmp.ne.s32.totalorder %s84, %s86
      %p90 = scmp.eq.s32.totalorder %s15, 0
      %p91 = por %p89, %p90
      %p92 = scmp.ne.s32.totalorder %s84, %s86
      %p93 = scmp.eq.s32.totalorder %s20, 1
      %p94 = por %p92, %p93
      %p95 = scmp.ne.s32.totalorder %s86, %s87
      %p96 = scmp.eq.s32.totalorder %s20, 0
      %p97 = por %p95, %p96
      %p98 = scmp.ne.s32.totalorder %s86, %s87
      %p99 = scmp.eq.s32.totalorder %s21, 1
      %p100 = por %p98, %p99
      %p102 = scmp.ne.s32.totalorder %s87, %s101
      %p103 = scmp.eq.s32.totalorder %s21, 0
      %p104 = por %p102, %p103
      %s106 = sadd.s32 %s105, 1
      %p109 = scmp.eq.s32.totalorder %s15, 1
      %p110 = scmp.ne.s32.totalorder %s105, %s107
      %p111 = scmp.eq.s32.totalorder %s15, 0
      %p112 = por %p110, %p111
      %p113 = scmp.ne.s32.totalorder %s105, %s107
      %p114 = scmp.eq.s32.totalorder %s20, 1
      %p115 = por %p113, %p114
      %p116 = scmp.ne.s32.totalorder %s107, %s108
      %p117 = scmp.eq.s32.totalorder %s20, 0
      %p118 = por %p116, %p117
      %p119 = scmp.ne.s32.totalorder %s107, %s108
      %p120 = scmp.eq.s32.totalorder %s21, 1
      %p121 = por %p119, %p120
      %p123 = scmp.ne.s32.totalorder %s108, %s122
      %p124 = scmp.eq.s32.totalorder %s21, 0
      %p125 = por %p123, %p124
      %s127 = sadd.s32 %s126, 1
      %p130 = scmp.eq.s32.totalorder %s15, 1
      %p131 = scmp.ne.s32.totalorder %s126, %s128
      %p132 = scmp.eq.s32.totalorder %s15, 0
      %p133 = por %p131, %p132
      %p134 = scmp.ne.s32.totalorder %s126, %s128
      %p135 = scmp.eq.s32.totalorder %s20, 1
      %p136 = por %p134, %p135
      %p137 = scmp.ne.s32.totalorder %s128, %s129
      %p138 = scmp.eq.s32.totalorder %s20, 0
      %p139 = por %p137, %p138
      %p140 = scmp.ne.s32.totalorder %s128, %s129
      %p141 = scmp.eq.s32.totalorder %s21, 1
      %p142 = por %p140, %p141
      %p144 = scmp.ne.s32.totalorder %s129, %s143
      %p145 = scmp.eq.s32.totalorder %s21, 0
      %p146 = por %p144, %p145
      %s147 = ssub.s32 %s23, %s30
      %p148 = scmp.eq.s32.totalorder %s147, 0
      %s150 = sadd.s32 %s149, 1
      %s151 = scalar_select %p148, %s149, %s150
      %p154 = pneg %p148
      %p155 = scmp.eq.s32.totalorder %s15, 1
      %p156 = por %p154, %p155
      %p157 = scmp.ne.s32.totalorder %s149, %s152
      %p158 = scmp.eq.s32.totalorder %s15, 0
      %p159 = por %p157, %p158
      %p160 = scmp.ne.s32.totalorder %s149, %s152
      %p161 = scmp.eq.s32.totalorder %s20, 1
      %p162 = por %p160, %p161
      %p163 = scmp.ne.s32.totalorder %s152, %s153
      %p164 = scmp.eq.s32.totalorder %s20, 0
      %p165 = por %p163, %p164
      %p166 = scmp.ne.s32.totalorder %s152, %s153
      %p167 = scmp.eq.s32.totalorder %s21, 1
      %p168 = por %p166, %p167
      %p170 = scmp.ne.s32.totalorder %s153, %s169
      %p171 = scmp.eq.s32.totalorder %s21, 0
      %p172 = por %p170, %p171
      %s173 = ssub.s32 %s22, %s34
      %s174 = ssub.s32 %s23, %s30
      %s175 = sor.u32 %s173, %s174
      %p176 = scmp.eq.s32.totalorder %s175, 0
      %s178 = sadd.s32 %s177, 1
      %s179 = scalar_select %p176, %s177, %s178
      %p182 = pneg %p176
      %p183 = scmp.eq.s32.totalorder %s15, 1
      %p184 = por %p182, %p183
      %p185 = scmp.ne.s32.totalorder %s177, %s180
      %p186 = scmp.eq.s32.totalorder %s15, 0
      %p187 = por %p185, %p186
      %p188 = scmp.ne.s32.totalorder %s177, %s180
      %p189 = scmp.eq.s32.totalorder %s20, 1
      %p190 = por %p188, %p189
      %p191 = scmp.ne.s32.totalorder %s180, %s181
      %p192 = scmp.eq.s32.totalorder %s20, 0
      %p193 = por %p191, %p192
      %p194 = scmp.ne.s32.totalorder %s180, %s181
      %p195 = scmp.eq.s32.totalorder %s21, 1
      %p196 = por %p194, %p195
      %p198 = scmp.ne.s32.totalorder %s181, %s197
      %p199 = scmp.eq.s32.totalorder %s21, 0
      %p200 = por %p198, %p199
      %p201 = scmp.le.s32.totalorder 1, %s15
      %p202 = scmp.lt.s32.totalorder %s15, 3
      %p203 = pnand %p201, %p202
      %p204 = pneg %p203
      // Predicated region
      $region9: #{tpu_custom_call.1} parent=5 // pred_check
        _
      $region10: #{tpu_custom_call.1} parent=5 // pred_check_branch
        %206 = sbr.rel (%p203) target = $region12
      $region11: #{tpu_custom_call.1} parent=5 // pred_region
        %s207 = ssub.s32 %s15, 1
        // Predicated region
        $region13: #{tpu_custom_call.1} parent=11 // pred_check
          %p208 = pneg %p76
        $region14: #{tpu_custom_call.1} parent=11 // pred_check_branch
          %210 = sbr.rel (%p208) target = $region16
        $region15: #{tpu_custom_call.1} parent=11 // pred_region
          _
        $region16: #{tpu_custom_call.1} parent=11 // pred_fallthru
          _
        // Predicated region
        $region17: #{tpu_custom_call.1} parent=11 // pred_check
          %p211 = pneg %p97
        $region18: #{tpu_custom_call.1} parent=11 // pred_check_branch
          %213 = sbr.rel (%p211) target = $region20
        $region19: #{tpu_custom_call.1} parent=11 // pred_region
          _
        $region20: #{tpu_custom_call.1} parent=11 // pred_fallthru
          _
        // Predicated region
        $region21: #{tpu_custom_call.1} parent=11 // pred_check
          %p214 = pneg %p118
        $region22: #{tpu_custom_call.1} parent=11 // pred_check_branch
          %216 = sbr.rel (%p214) target = $region24
        $region23: #{tpu_custom_call.1} parent=11 // pred_region
          _
        $region24: #{tpu_custom_call.1} parent=11 // pred_fallthru
          _
        // Predicated region
        $region25: #{tpu_custom_call.1} parent=11 // pred_check
          %p217 = pneg %p139
        $region26: #{tpu_custom_call.1} parent=11 // pred_check_branch
          %219 = sbr.rel (%p217) target = $region28
        $region27: #{tpu_custom_call.1} parent=11 // pred_region
          _
        $region28: #{tpu_custom_call.1} parent=11 // pred_fallthru
          _
        // Predicated region
        $region29: #{tpu_custom_call.1} parent=11 // pred_check
          %p220 = pneg %p165
        $region30: #{tpu_custom_call.1} parent=11 // pred_check_branch
          %222 = sbr.rel (%p220) target = $region32
        $region31: #{tpu_custom_call.1} parent=11 // pred_region
          %s223 = smul.u32 2, %s25
          %p224 = scmp.lt.s32.totalorder %s223, 1
          %s225 = scalar_select %p224, %s223, 1
          %s226 = smul.addr %s225, 2
          %s227 = scalar_lea.vmem %s5, %s226
          %s228 = smul.u32 2, %s25
        $region32: #{tpu_custom_call.1} parent=11 // pred_fallthru
          _
      $region12: #{tpu_custom_call.1} parent=5 // pred_fallthru
        _
      %p229 = scmp.lt.s32.totalorder %s15, 2
      // Predicated region
      $region33: #{tpu_custom_call.1} parent=5 // pred_check
        %p230 = pneg %p229
      $region34: #{tpu_custom_call.1} parent=5 // pred_check_branch
        %232 = sbr.rel (%p230) target = $region36
      $region35: #{tpu_custom_call.1} parent=5 // pred_region
        // Predicated region
        $region37: #{tpu_custom_call.1} parent=35 // pred_check
          %p233 = pneg %p49
        $region38: #{tpu_custom_call.1} parent=35 // pred_check_branch
          %235 = sbr.rel (%p233) target = $region40
        $region39: #{tpu_custom_call.1} parent=35 // pred_region
          %s236 = sand.u32 %s39, 1
          %s237 = scalar_lea.sflag [#allocation3], %s236
          %s238 = sand.u32 %s39, 1
          %s239 = smul.addr %s238, 64
          %s240 = scalar_lea.vmem [#allocation2], %s239
          %s241 = smul.u32 2, %s23
          %s243 = ssub.s32 1024, 1024
          %244 = vsyncadd %s237, %s243
          %s245 = smul.addr %s22, 8
          %s246 = sadd.s32 %s241, %s245
          %s247 = smul.addr %s246, 128
          %s248 = scalar_lea.hbm %s0, %s247
          %s249 = sshll.u32 %s240, 4
          %s250 = int_to_ptr.vmem [resolvable:$true] %s249
          %255 = dma.hbm_to_vmem [thread:$0]  %s248, 1024, %s250, %s237, 256, 256, 16
        $region40: #{tpu_custom_call.1} parent=35 // pred_fallthru
          _
      $region36: #{tpu_custom_call.1} parent=5 // pred_fallthru
        _
      %p256 = scmp.le.s32.totalorder 1, %s15
      %p257 = scmp.lt.s32.totalorder %s15, 3
      %p258 = pnand %p256, %p257
      %p259 = pneg %p258
      // Predicated region
      $region41: #{tpu_custom_call.1} parent=5 // pred_check
        _
      $region42: #{tpu_custom_call.1} parent=5 // pred_check_branch
        %261 = sbr.rel (%p258) target = $region44
      $region43: #{tpu_custom_call.1} parent=5 // pred_region
        %s262 = ssub.s32 %s15, 1
        %s263 = sand.u32 %s42, 1
        %s264 = scalar_lea.sflag [#allocation3], %s263
        %s265 = sand.u32 %s42, 1
        %s266 = smul.addr %s265, 64
        %s267 = scalar_lea.vmem [#allocation2], %s266
        // Predicated region
        $region45: #{tpu_custom_call.1} parent=43 // pred_check
          %p268 = pneg %p55
        $region46: #{tpu_custom_call.1} parent=43 // pred_check_branch
          %270 = sbr.rel (%p268) target = $region48
        $region47: #{tpu_custom_call.1} parent=43 // pred_region
          %271 = dma.done %s264, 1024
        $region48: #{tpu_custom_call.1} parent=43 // pred_fallthru
          _
        %s272 = sand.u32 %s42, 1
        %s273 = scalar_lea.sflag [#allocation3], %s272
        %s274 = sand.u32 %s42, 1
        %s275 = smul.addr %s274, 64
        %s276 = scalar_lea.vmem [#allocation2], %s275
        %p277 = pneg %p55
        %p278 = pneg %p52
        %p279 = pneg %p76
        %p280 = pneg %p73
        %p281 = pneg %p97
        %p282 = pneg %p94
        %p283 = pneg %p118
        %p284 = pneg %p115
        %p285 = pneg %p139
        %p286 = pneg %p136
        %s287 = smul.u32 2, %s25
        %p288 = scmp.lt.s32.totalorder %s287, 1
        %s289 = scalar_select %p288, %s287, 1
        %s290 = smul.addr %s289, 2
        %s291 = scalar_lea.vmem %s5, %s290
        %p292 = pneg %p165
        %p293 = pneg %p162
        %p294 = pneg %p193
        %p295 = pneg %p190
        %s296 = smul.u32 2, %s25
        %p297 = scmp.lt.s32.totalorder %s24, 1
        %s298 = scalar_select %p297, %s24, 1
        %p299 = scmp.lt.s32.totalorder %s296, 1
        %s300 = scalar_select %p299, %s296, 1
        %s301 = smul.addr %s298, 8
        %s302 = sadd.s32 %s300, %s301
        %s303 = smul.addr %s302, 8
        %s304 = scalar_lea.vmem %s6, %s303
        %s305 = smul.u32 2, %s25
        %s306 = smul.u32 2, %s25
        %p307 = scmp.lt.s32.totalorder %s306, 1
        %s308 = scalar_select %p307, %s306, 1
        %s309 = smul.addr %s308, 2
        %s310 = scalar_lea.vmem %s5, %s309
        %s311 = smul.u32 2, %s25
        %s312 = smul.u32 2, %s25
        %p313 = scmp.lt.s32.totalorder %s24, 1
        %s314 = scalar_select %p313, %s24, 1
        %p315 = scmp.lt.s32.totalorder %s312, 1
        %s316 = scalar_select %p315, %s312, 1
        %s317 = smul.addr %s314, 8
        %s318 = sadd.s32 %s316, %s317
        %s319 = smul.addr %s318, 8
        %s320 = scalar_lea.vmem %s6, %s319
        %s321 = smul.u32 2, %s25
        %v322 = vld [vmem:[%s1] sm:$0xff]
        %v323 = vld [vmem:[%s1 + $0x8] sm:$0xff]
        %v324 = vld [vmem:[%s1 + $0x10] sm:$0xff]
        %v325 = vld [vmem:[%s1 + $0x18] sm:$0x7]
        %v326 = vld [vmem:[%s267] sm:$0xff]
        %v327 = vld [vmem:[%s267 + $0x8] sm:$0xff]
        %v328 = vld [vmem:[%s267 + $0x10] sm:$0xff]
        %v329 = vld [vmem:[%s267 + $0x18] sm:$0xff]
        %v330 = vld [vmem:[%s267 + $0x20] sm:$0xff]
        %v331 = vld [vmem:[%s267 + $0x28] sm:$0xff]
        %v332 = vld [vmem:[%s267 + $0x30] sm:$0xff]
        %v333 = vld [vmem:[%s267 + $0x38] sm:$0xff]
        %v334 = vld [vmem:[%s2] sm:$0xff]
        %v335 = vld [vmem:[%s2 + $0x8] sm:$0xff]
        %v336 = vld [vmem:[%s2 + $0x10] sm:$0xff]
        %v337 = vld [vmem:[%s2 + $0x18] sm:$0x7]
        %339 = vset.pattern.permute.xlu0 0
        %340 = vperm.xlu0 %339, %v334
        %v341 = vpop.permute.xlu0 %340
        %344 = vset.pattern.permute.xlu0 0
        %345 = vperm.xlu0 %344, %v335
        %v346 = vpop.permute.xlu0 %345
        %349 = vset.pattern.permute.xlu0 0
        %350 = vperm.xlu0 %349, %v336
        %v351 = vpop.permute.xlu0 %350
        %354 = vset.pattern.permute.xlu0 0
        %355 = vperm.xlu0 %354, %v337
        %v356 = vpop.permute.xlu0 %355
        %vm358 = vcmask 261120
        %v360 = vsel %vm358, %v322, 0
        %v363 = vsel %vm358, %v323, 0
        %v366 = vsel %vm358, %v324, 0
        %v369 = vsel %vm358, %v325, 0
        %371 = vmatprep.subr.mxu0 %v327
        %372 = vmatpush1.msra.mxu0 %v326
        %373 = vmatprep.subr.mxu0 %v329
        %374 = vmatpush1.msra.mxu0 %v328
        %375 = vmatprep.subr.mxu0 %v331
        %376 = vmatpush1.msra.mxu0 %v330
        %377 = vmatprep.subr.mxu0 %v333
        %378 = vmatpush1.msra.mxu0 %v332
        %379 = vmatprep.subr.mxu0 0.0
        %380 = vmatpush1.msra.mxu0 0.0
        %381 = vmatprep.subr.mxu0 0.0
        %382 = vmatpush1.msra.mxu0 0.0
        %383 = vmatprep.subr.mxu0 0.0
        %384 = vmatpush1.msra.mxu0 0.0
        %385 = vmatprep.subr.mxu0 0.0
        %386 = vmatpush1.msra.mxu0 0.0
        %387 = vmatprep.subr.mxu0 0.0
        %388 = vmatpush1.msra.mxu0 0.0
        %389 = vmatprep.subr.mxu0 0.0
        %390 = vmatpush1.msra.mxu0 0.0
        %391 = vmatprep.subr.mxu0 0.0
        %392 = vmatpush1.msra.mxu0 0.0
        %393 = vmatprep.subr.mxu0 0.0
        %394 = vmatpush1.msra.mxu0 0.0
        %395 = vmatprep.subr.mxu0 0.0
        %396 = vmatpush1.msra.mxu0 0.0
        %397 = vmatprep.subr.mxu0 0.0
        %398 = vmatpush1.msra.mxu0 0.0
        %399 = vmatprep.subr.mxu0 0.0
        %400 = vmatpush1.msra.mxu0 0.0
        %401 = vmatprep.subr.mxu0 0.0
        %402 = vmatpush1.msra.mxu0 0.0
        %403 = vmatprep.subr.mxu0 0.0
        %404 = vmatpush1.msra.mxu0 0.0
        %405 = vmatprep.subr.mxu0 0.0
        %406 = vmatpush1.msra.mxu0 0.0
        %407 = vmatprep.subr.mxu0 0.0
        %408 = vmatpush1.msra.mxu0 0.0
        %409 = vmatprep.subr.mxu0 0.0
        %410 = vmatpush1.msra.mxu0 0.0
        %411 = vmatprep.subr.mxu0 0.0
        %412 = vmatpush1.msra.mxu0 0.0
        %413 = vmatprep.subr.mxu0 0.0
        %414 = vmatpush1.msra.mxu0 0.0
        %415 = vmatprep.subr.mxu0 0.0
        %416 = vmatpush1.msra.mxu0 0.0
        %417 = vmatprep.subr.mxu0 0.0
        %418 = vmatpush1.msra.mxu0 0.0
        %419 = vmatprep.subr.mxu0 0.0
        %420 = vmatpush1.msra.mxu0 0.0
        %421 = vmatprep.subr.mxu0 0.0
        %422 = vmatpush1.msra.mxu0 0.0
        %423 = vmatprep.subr.mxu0 0.0
        %424 = vmatpush1.msra.mxu0 0.0
        %425 = vmatprep.subr.mxu0 0.0
        %426 = vmatpush1.msra.mxu0 0.0
        %427 = vmatprep.subr.mxu0 0.0
        %428 = vmatpush1.msra.mxu0 0.0
        %429 = vmatprep.subr.mxu0 0.0
        %430 = vmatpush1.msra.mxu0 0.0
        %431 = vmatprep.subr.mxu0 0.0
        %432 = vmatpush1.msra.mxu0 0.0
        %433 = vmatprep.subr.mxu0 0.0
        %434 = vmatpush1.msra.mxu0 0.0
        %435 = vmatprep.mubr.f32.mxu0 0.0
        %436 = vmatmul.mubr.f32.gmra.mrb[0].mxu0 %v360
        %v437 = vpop.f32.mrb[0].mxu0
        %v438 = vadd.f32 %v341, %v437
        %v439 = vpop.f32.mrb[0].mxu0
        %v440 = vadd.f32 %v341, %v439
        %441 = vmatprep.mubr.f32.mxu0 0.0
        %442 = vmatmul.mubr.f32.gmra.mrb[0].mxu0 %v363
        %v443 = vpop.f32.mrb[0].mxu0
        %v444 = vadd.f32 %v346, %v443
        %v445 = vpop.f32.mrb[0].mxu0
        %v446 = vadd.f32 %v346, %v445
        %447 = vmatprep.mubr.f32.mxu0 0.0
        %448 = vmatmul.mubr.f32.gmra.mrb[0].mxu0 %v366
        %v449 = vpop.f32.mrb[0].mxu0
        %v450 = vadd.f32 %v351, %v449
        %v451 = vpop.f32.mrb[0].mxu0
        %v452 = vadd.f32 %v351, %v451
        %453 = vmatprep.mubr.f32.mxu0 0.0
        %454 = vmatmul.mubr.f32.gmra.mrb[0].mxu0 %v369
        %v455 = vpop.f32.mrb[0].mxu0
        %v456 = vadd.f32 %v356, %v455
        %v457 = vpop.f32.mrb[0].mxu0
        %v458 = vadd.f32 %v356, %v457
        %459 = vdwg.mxu0
        %v460 = vxor.u32 %v438, 2147483648
        %v461 = vxor.u32 %v440, 2147483648
        %v462 = vxor.u32 %v444, 2147483648
        %v463 = vxor.u32 %v446, 2147483648
        %v464 = vxor.u32 %v450, 2147483648
        %v465 = vxor.u32 %v452, 2147483648
        %v466 = vxor.u32 %v456, 2147483648
        %v467 = vxor.u32 %v458, 2147483648
        %v468 = vmul.f32 %v460, 1.442695
        %v469 = vpow.pop %v468
        %v470 = vmul.f32 %v461, 1.442695
        %v471 = vpow.pop %v470
        %v472 = vmul.f32 %v462, 1.442695
        %v473 = vpow.pop %v472
        %v474 = vmul.f32 %v463, 1.442695
        %v475 = vpow.pop %v474
        %v476 = vmul.f32 %v464, 1.442695
        %v477 = vpow.pop %v476
        %v478 = vmul.f32 %v465, 1.442695
        %v479 = vpow.pop %v478
        %v480 = vmul.f32 %v466, 1.442695
        %v481 = vpow.pop %v480
        %v482 = vmul.f32 %v467, 1.442695
        %v483 = vpow.pop %v482
        %v484 = vadd.f32 %v469, 1.0
        %v485 = vadd.f32 %v471, 1.0
        %v486 = vadd.f32 %v473, 1.0
        %v487 = vadd.f32 %v475, 1.0
        %v488 = vadd.f32 %v477, 1.0
        %v489 = vadd.f32 %v479, 1.0
        %v490 = vadd.f32 %v481, 1.0
        %v491 = vadd.f32 %v483, 1.0
        %v492 = vrcp.pop %v484
        %v493 = vmul.f32 1.0, %v492
        %v494 = vrcp.pop %v485
        %v495 = vmul.f32 1.0, %v494
        %v496 = vrcp.pop %v486
        %v497 = vmul.f32 1.0, %v496
        %v498 = vrcp.pop %v487
        %v499 = vmul.f32 1.0, %v498
        %v500 = vrcp.pop %v488
        %v501 = vmul.f32 1.0, %v500
        %v502 = vrcp.pop %v489
        %v503 = vmul.f32 1.0, %v502
        %v504 = vrcp.pop %v490
        %v505 = vmul.f32 1.0, %v504
        %v506 = vrcp.pop %v491
        %v507 = vmul.f32 1.0, %v506
        %v508 = vmul.f32 %v438, 1.442695
        %v509 = vpow.pop %v508
        %v510 = vmul.f32 %v440, 1.442695
        %v511 = vpow.pop %v510
        %v512 = vmul.f32 %v444, 1.442695
        %v513 = vpow.pop %v512
        %v514 = vmul.f32 %v446, 1.442695
        %v515 = vpow.pop %v514
        %v516 = vmul.f32 %v450, 1.442695
        %v517 = vpow.pop %v516
        %v518 = vmul.f32 %v452, 1.442695
        %v519 = vpow.pop %v518
        %v520 = vmul.f32 %v456, 1.442695
        %v521 = vpow.pop %v520
        %v522 = vmul.f32 %v458, 1.442695
        %v523 = vpow.pop %v522
        %v524 = vld [vmem:[%s4] sm:$0xff]
        %v525 = vld [vmem:[%s4 + $0x8] sm:$0xff]
        %v526 = vld [vmem:[%s4 + $0x10] sm:$0xff]
        %v527 = vld [vmem:[%s4 + $0x18] sm:$0x7]
        %v528 = vld [vmem:[%s310] ss:$2 sm:$0x3]
        %s529 = scalar_lea.vmem %s310, 1
        %v530 = vld [vmem:[%s529] ss:$2 sm:$0x3]
        %vm531 = vcmp.eq.f32.partialorder %v524, 0.0
        %vm532 = vcmp.eq.f32.partialorder %v525, 0.0
        %vm533 = vcmp.eq.f32.partialorder %v526, 0.0
        %vm534 = vcmp.eq.f32.partialorder %v527, 0.0
        %vm535 = vcmp.eq.f32.partialorder %v524, 1.0
        %vm536 = vcmp.eq.f32.partialorder %v525, 1.0
        %vm537 = vcmp.eq.f32.partialorder %v526, 1.0
        %vm538 = vcmp.eq.f32.partialorder %v527, 1.0
        %v539 = vsel %vm535, 1, 0
        %v540 = vsel %vm536, 1, 0
        %v541 = vsel %vm537, 1, 0
        %v542 = vsel %vm538, 1, 0
        %543 = vset.pattern.permute.xlu0 0
        %544 = vperm.xlu0 %543, %v539
        %v545 = vpop.permute.xlu0 %544
        %546 = vset.pattern.permute.xlu0 0
        %547 = vperm.xlu0 %546, %v540
        %v548 = vpop.permute.xlu0 %547
        %549 = vset.pattern.permute.xlu0 0
        %550 = vperm.xlu0 %549, %v541
        %v551 = vpop.permute.xlu0 %550
        %552 = vset.pattern.permute.xlu0 0
        %553 = vperm.xlu0 %552, %v542
        %v554 = vpop.permute.xlu0 %553
        %vm555 = vcmp.eq.s32.totalorder %v545, 1
        %vm556 = vcmp.eq.s32.totalorder %v548, 1
        %vm557 = vcmp.eq.s32.totalorder %v551, 1
        %vm558 = vcmp.eq.s32.totalorder %v554, 1
        %v560 = vlaneseq
        %v561 = vshrl.u32 %v560, 7
        %v562 = vsub.s32 0, %v561
        %v563 = vrot.slane %v530, %v562
        %v564 = vlaneseq
        %v565 = vshrl.u32 %v564, 7
        %v566 = vsub.s32 1, %v565
        %v567 = vrot.slane %v530, %v566
        %v570 = vsel %vm555, %v563, 0.0
        %v571 = vsel %vm555, %v567, 0.0
        %v572 = vsel %vm556, %v563, 0.0
        %v573 = vsel %vm556, %v567, 0.0
        %v574 = vsel %vm557, %v563, 0.0
        %v575 = vsel %vm557, %v567, 0.0
        %v576 = vsel %vm558, %v563, 0.0
        %v577 = vsel %vm558, %v567, 0.0
        %v578 = vsel %vm531, 1, 0
        %v579 = vsel %vm532, 1, 0
        %v580 = vsel %vm533, 1, 0
        %v581 = vsel %vm534, 1, 0
        %582 = vset.pattern.permute.xlu0 0
        %583 = vperm.xlu0 %582, %v578
        %v584 = vpop.permute.xlu0 %583
        %585 = vset.pattern.permute.xlu0 0
        %586 = vperm.xlu0 %585, %v579
        %v587 = vpop.permute.xlu0 %586
        %588 = vset.pattern.permute.xlu0 0
        %589 = vperm.xlu0 %588, %v580
        %v590 = vpop.permute.xlu0 %589
        %591 = vset.pattern.permute.xlu0 0
        %592 = vperm.xlu0 %591, %v581
        %v593 = vpop.permute.xlu0 %592
        %vm594 = vcmp.eq.s32.totalorder %v584, 1
        %vm595 = vcmp.eq.s32.totalorder %v587, 1
        %vm596 = vcmp.eq.s32.totalorder %v590, 1
        %vm597 = vcmp.eq.s32.totalorder %v593, 1
        %v599 = vlaneseq
        %v600 = vshrl.u32 %v599, 7
        %v601 = vsub.s32 0, %v600
        %v602 = vrot.slane %v528, %v601
        %v603 = vlaneseq
        %v604 = vshrl.u32 %v603, 7
        %v605 = vsub.s32 1, %v604
        %v606 = vrot.slane %v528, %v605
        %v609 = vsel %vm594, %v602, %v570
        %v610 = vsel %vm594, %v606, %v571
        %v611 = vsel %vm595, %v602, %v572
        %v612 = vsel %vm595, %v606, %v573
        %v613 = vsel %vm596, %v602, %v574
        %v614 = vsel %vm596, %v606, %v575
        %v615 = vsel %vm597, %v602, %v576
        %v616 = vsel %vm597, %v606, %v577
        %vm617 = vcmp.eq.f32.partialorder %v524, 2.0
        %vm618 = vcmp.eq.f32.partialorder %v525, 2.0
        %vm619 = vcmp.eq.f32.partialorder %v526, 2.0
        %vm620 = vcmp.eq.f32.partialorder %v527, 2.0
        %v621 = vadd.f32 %v493, %v609
        %v622 = vadd.f32 %v495, %v610
        %v623 = vadd.f32 %v497, %v611
        %v624 = vadd.f32 %v499, %v612
        %v625 = vadd.f32 %v501, %v613
        %v626 = vadd.f32 %v503, %v614
        %v627 = vadd.f32 %v505, %v615
        %v628 = vadd.f32 %v507, %v616
        %v629 = vsel %vm617, 1, 0
        %v630 = vsel %vm618, 1, 0
        %v631 = vsel %vm619, 1, 0
        %v632 = vsel %vm620, 1, 0
        %633 = vset.pattern.permute.xlu0 0
        %634 = vperm.xlu0 %633, %v629
        %v635 = vpop.permute.xlu0 %634
        %636 = vset.pattern.permute.xlu0 0
        %637 = vperm.xlu0 %636, %v630
        %v638 = vpop.permute.xlu0 %637
        %639 = vset.pattern.permute.xlu0 0
        %640 = vperm.xlu0 %639, %v631
        %v641 = vpop.permute.xlu0 %640
        %642 = vset.pattern.permute.xlu0 0
        %643 = vperm.xlu0 %642, %v632
        %v644 = vpop.permute.xlu0 %643
        %vm645 = vcmp.eq.s32.totalorder %v635, 1
        %vm646 = vcmp.eq.s32.totalorder %v638, 1
        %vm647 = vcmp.eq.s32.totalorder %v641, 1
        %vm648 = vcmp.eq.s32.totalorder %v644, 1
        %v649 = vsel %vm645, %v509, %v621
        %v650 = vsel %vm645, %v511, %v622
        %v651 = vsel %vm646, %v513, %v623
        %v652 = vsel %vm646, %v515, %v624
        %v653 = vsel %vm647, %v517, %v625
        %v654 = vsel %vm647, %v519, %v626
        %v655 = vsel %vm648, %v521, %v627
        %v656 = vsel %vm648, %v523, %v628
        %v657 = vld [vmem:[%s3] sm:$0xff]
        %v658 = vld [vmem:[%s3 + $0x8] sm:$0xff]
        %v659 = vld [vmem:[%s3 + $0x10] sm:$0xff]
        %v660 = vld [vmem:[%s3 + $0x18] sm:$0x7]
        %662 = vset.pattern.permute.xlu0 0
        %663 = vperm.xlu0 %662, %v657
        %v664 = vpop.permute.xlu0 %663
        %667 = vset.pattern.permute.xlu0 0
        %668 = vperm.xlu0 %667, %v658
        %v669 = vpop.permute.xlu0 %668
        %672 = vset.pattern.permute.xlu0 0
        %673 = vperm.xlu0 %672, %v659
        %v674 = vpop.permute.xlu0 %673
        %677 = vset.pattern.permute.xlu0 0
        %678 = vperm.xlu0 %677, %v660
        %v679 = vpop.permute.xlu0 %678
        %v681 = vmul.f32 %v649, %v664
        %v682 = vmul.f32 %v650, %v664
        %v683 = vmul.f32 %v651, %v669
        %v684 = vmul.f32 %v652, %v669
        %v685 = vmul.f32 %v653, %v674
        %v686 = vmul.f32 %v654, %v674
        %v687 = vmul.f32 %v655, %v679
        %v688 = vmul.f32 %v656, %v679
        %689 = vst [vmem:[%s320] sm:$0xff] %v681
        %690 = vst [vmem:[%s320 + $0x8] sm:$0xff] %v682
        %691 = vst [vmem:[%s320 + $0x10] sm:$0xff] %v683
        %692 = vst [vmem:[%s320 + $0x18] sm:$0xff] %v684
        %693 = vst [vmem:[%s320 + $0x20] sm:$0xff] %v685
        %694 = vst [vmem:[%s320 + $0x28] sm:$0xff] %v686
        %695 = vst [vmem:[%s320 + $0x30] sm:$0x7] %v687
        %696 = vst [vmem:[%s320 + $0x38] sm:$0x7] %v688
        %s697 = smul.u32 2, %s25
        %p698 = scmp.lt.s32.totalorder %s24, 1
        %s699 = scalar_select %p698, %s24, 1
        %p700 = scmp.lt.s32.totalorder %s697, 1
        %s701 = scalar_select %p700, %s697, 1
        %s702 = smul.addr %s699, 8
        %s703 = sadd.s32 %s701, %s702
        %s704 = smul.addr %s703, 8
        %s705 = scalar_lea.vmem %s6, %s704
        // Predicated region
        $region49: #{tpu_custom_call.1} parent=43 // pred_check
          %p706 = pneg %p190
        $region50: #{tpu_custom_call.1} parent=43 // pred_check_branch
          %708 = sbr.rel (%p706) target = $region52
        $region51: #{tpu_custom_call.1} parent=43 // pred_region
          %s709 = smul.u32 2, %s25
        $region52: #{tpu_custom_call.1} parent=43 // pred_fallthru
          _
      $region44: #{tpu_custom_call.1} parent=5 // pred_fallthru
        _
      %p710 = scmp.le.s32.totalorder 2, %s15
      // Predicated region
      $region53: #{tpu_custom_call.1} parent=5 // pred_check
        %p711 = pneg %p710
      $region54: #{tpu_custom_call.1} parent=5 // pred_check_branch
        %713 = sbr.rel (%p711) target = $region56
      $region55: #{tpu_custom_call.1} parent=5 // pred_region
        %s714 = ssub.s32 %s15, 2
        // Predicated region
        $region57: #{tpu_custom_call.1} parent=55 // pred_check
          %p715 = pneg %p196
        $region58: #{tpu_custom_call.1} parent=55 // pred_check_branch
          %717 = sbr.rel (%p715) target = $region60
        $region59: #{tpu_custom_call.1} parent=55 // pred_region
          %s718 = smul.u32 2, %s27
          %p719 = scmp.lt.s32.totalorder %s26, 1
          %s720 = scalar_select %p719, %s26, 1
          %p721 = scmp.lt.s32.totalorder %s718, 1
          %s722 = scalar_select %p721, %s718, 1
          %s723 = smul.addr %s720, 8
          %s724 = sadd.s32 %s722, %s723
          %s725 = smul.addr %s724, 8
          %s726 = scalar_lea.vmem %s6, %s725
        $region60: #{tpu_custom_call.1} parent=55 // pred_fallthru
          _
      $region56: #{tpu_custom_call.1} parent=5 // pred_fallthru
        _
    $region6: #{tpu_custom_call.1} parent=1 // loop_footer
      %s19 = sadd.s32 1, %s15
    $region7: #{tpu_custom_call.1} parent=1 // loop_footer_branch
      %14 = sbr.rel target = $region3
    $region8: #{tpu_custom_call.1} parent=1 // loop_exit
      _
    %727 = vsyncpa [#allocation3], 1
    %s728 = scalar_lea.sflag [#allocation3], 1
    %729 = vsyncpa %s728, 1

</llo_original>
